<compile_context>
chip_gen: v7x
topology: tpu7x:2x2x1
jax: 0.10.0
libtpu: 0.0.40
codegen_flags: <defaults>
</compile_context>

<pallas_src>
import numpy as np
import jax
import jax.numpy as jnp
from jax.experimental import pallas as pl
from jax.experimental.pallas import tpu as pltpu


# -----------------------------------------------------------------------------
# Nearest-neighbor index helpers (PyTorch mode='nearest' semantics:
# src = min(floor(dst * (float(in)/out)), in-1), computed in float32).
# -----------------------------------------------------------------------------
def _nearest_src_indices(out_size: int, in_size: int) -> np.ndarray:
    scale = np.float32(in_size) / np.float32(out_size)
    idx = np.floor(np.arange(out_size, dtype=np.float32) * scale).astype(np.int64)
    return np.minimum(idx, in_size - 1)


def _runs_from_indices(idx: np.ndarray):
    """Group (monotone) nearest indices into (src, run_length) runs."""
    runs = []
    i, n = 0, len(idx)
    while i < n:
        j = i
        while j < n and idx[j] == idx[i]:
            j += 1
        runs.append((int(idx[i]), j - i))
        i = j
    return runs


# -----------------------------------------------------------------------------
# Chip-aware VMEM budgeting.
# -----------------------------------------------------------------------------
def _chip_profile():
    """Returns (block budget bytes, vmem_limit_bytes, has_two_tensorcores)."""
    try:
        kind = jax.devices()[0].device_kind.lower()
    except Exception:
        kind = ""
    if "v7" in kind:                                  # 64 MiB VMEM per TC, 2 TCs
        return 24 << 20, 44 << 20, True
    if "v6" in kind:                                  # 128 MiB VMEM, 1 TC
        return 48 << 20, 88 << 20, False
    if "v5e" in kind or "v5 lite" in kind or "v5lite" in kind:
        return 40 << 20, 80 << 20, False              # 128 MiB VMEM, 1 TC
    if "v5p" in kind or "v5" in kind or "v4" in kind:
        return 40 << 20, 80 << 20, True               # 128 MiB VMEM, megacore
    # Unknown part: conservative defaults safe on every generation.
    return 14 << 20, 32 << 20, True


def _pick_planes_per_step(nc: int, max_planes: int, two_tc: bool) -> int:
    b = max(1, int(max_planes))
    if two_tc and nc >= 16:
        b = min(b, nc // 2)        # keep >=2 grid steps so the 2nd TC gets work
    if b >= nc:
        return nc
    b = (b // 8) * 8               # keep second-to-minor block dim 8-aligned
    if b < 8:
        b = nc if nc <= 8 else 8
    return min(b, nc)


# -----------------------------------------------------------------------------
# Kernels.
# -----------------------------------------------------------------------------
def _make_combined_kernel(in_dtype):
    """Single-GEMM kernel on flattened lane-dense blocks."""
    if in_dtype == jnp.bfloat16:
        def kernel(x_ref, s_ref, o_ref):
            out = jnp.dot(x_ref[...], s_ref[...],
                          preferred_element_type=jnp.float32)
            o_ref[...] = out.astype(o_ref.dtype)
    else:
        def kernel(x_ref, s_ref, o_ref):
            s = s_ref[...]                                  # (HW, OHOW) bf16 {0,1}
            x = x_ref[...].astype(jnp.float32)              # (B, HW)
            # Exact 3-way bf16 split: x == x_hi + x_mid + x_lo (bit-exact for f32).
            x_hi = x.astype(jnp.bfloat16)
            r1 = x - x_hi.astype(jnp.float32)
            x_mid = r1.astype(jnp.bfloat16)
            r2 = r1 - x_mid.astype(jnp.float32)
            x_lo = r2.astype(jnp.bfloat16)
            out = jnp.dot(x_hi, s, preferred_element_type=jnp.float32)
            out = out + jnp.dot(x_mid, s, preferred_element_type=jnp.float32)
            out = out + jnp.dot(x_lo, s, preferred_element_type=jnp.float32)
            o_ref[...] = out.astype(o_ref.dtype)
    return kernel


def _make_copy_kernel(B, H, W, OH, OW, h_runs, w_runs):
    """Exact copy-gather fallback (any dtype, no MXU)."""
    def kernel(x_ref, o_ref):
        x = x_ref[...]                                      # (B, H, W)
        pieces = []
        for src, run in h_runs:
            p = x[:, src:src + 1, :]
            if run > 1:
                p = jnp.broadcast_to(p, (B, run, W))
            pieces.append(p)
        rows = pieces[0] if len(pieces) == 1 else jnp.concatenate(pieces, axis=1)
        cols = []
        for src, run in w_runs:
            p = rows[:, :, src:src + 1]
            if run > 1:
                p = jnp.broadcast_to(p, (B, OH, run))
            cols.append(p)
        out = cols[0] if len(cols) == 1 else jnp.concatenate(cols, axis=2)
        o_ref[...] = out
    return kernel


# -----------------------------------------------------------------------------
# Public entry point.
# -----------------------------------------------------------------------------
def resize_layer(x: jax.Array, size) -> jax.Array:
    """Nearest-neighbor resize of an NCHW tensor `x` to spatial `size` = (OH, OW)."""
    N, C, H, W = x.shape
    OH, OW = int(size[0]), int(size[1])
    NC, HW, OHOW = N * C, H * W, OH * OW
    itemsize = jnp.dtype(x.dtype).itemsize
    is_float = jnp.issubdtype(x.dtype, jnp.floating)

    iy = _nearest_src_indices(OH, H)
    ix = _nearest_src_indices(OW, W)

    budget, vmem_limit, two_tc = _chip_profile()

    # Per-plane VMEM footprint of the combined-GEMM path: double-buffered
    # in/out blocks + generous allowance for the split temporaries and the
    # f32 accumulator.
    s_bytes = HW * OHOW * 2                                 # resident bf16 one-hot S
    per_plane = 2 * (HW + OHOW) * itemsize + 20 * HW + 12 * OHOW
    use_combined = is_float and (2 * s_bytes + 8 * per_plane) <= budget

    if use_combined:
        # Combined one-hot selection matrix: S[h*W + w, oh*OW + ow] = 1.
        src_flat = (iy[:, None] * W + ix[None, :]).reshape(-1)
        s_np = np.zeros((HW, OHOW), dtype=np.float32)
        s_np[src_flat, np.arange(OHOW)] = 1.0
        s_mat = jnp.asarray(s_np, dtype=jnp.bfloat16)        # {0,1} exact in bf16

        B = _pick_planes_per_step(NC, (budget - 2 * s_bytes) // per_plane, two_tc)
        grid = (pl.cdiv(NC, B),)
        passes = 1 if x.dtype == jnp.bfloat16 else 3
        cost = pl.CostEstimate(
            flops=2 * NC * HW * OHOW * passes,
            transcendentals=0,
            bytes_accessed=NC * (HW + OHOW) * itemsize + s_bytes,
        )

        out2d = pl.pallas_call(
            _make_combined_kernel(x.dtype),
            out_shape=jax.ShapeDtypeStruct((NC, OHOW), x.dtype),
            grid_spec=pltpu.PrefetchScalarGridSpec(
                num_scalar_prefetch=0,
                grid=grid,
                in_specs=[
                    pl.BlockSpec((B, HW), lambda i: (i, 0)),
                    pl.BlockSpec((HW, OHOW), lambda i: (0, 0)),  # VMEM-resident S
                ],
                out_specs=pl.BlockSpec((B, OHOW), lambda i: (i, 0)),
            ),
            compiler_params=pltpu.CompilerParams(
                dimension_semantics=("parallel",),
                vmem_limit_bytes=vmem_limit,
            ),
            cost_estimate=cost,
        )(x.reshape(NC, HW), s_mat)
        return out2d.reshape(N, C, OH, OW)

    # ---- Fallback: exact copy-gather path (integer/bool inputs, or planes so
    # large that the combined selection matrix would not fit in VMEM).
    # TODO(synk): very large planes (e.g. 4K outputs) would additionally need an
    # OH-tiling grid axis to stay within VMEM; not needed at this model's sizes.
    h_runs = _runs_from_indices(iy)
    w_runs = _runs_from_indices(ix)
    per_plane_fb = 4 * (HW + OHOW) * itemsize
    B = max(1, min(NC, budget // max(per_plane_fb, 1)))
    grid = (pl.cdiv(NC, B),)
    out3d = pl.pallas_call(
        _make_copy_kernel(B, H, W, OH, OW, h_runs, w_runs),
        out_shape=jax.ShapeDtypeStruct((NC, OH, OW), x.dtype),
        grid_spec=pltpu.PrefetchScalarGridSpec(
            num_scalar_prefetch=0,
            grid=grid,
            in_specs=[pl.BlockSpec((B, H, W), lambda i: (i, 0, 0))],
            out_specs=pl.BlockSpec((B, OH, OW), lambda i: (i, 0, 0)),
        ),
        compiler_params=pltpu.CompilerParams(
            dimension_semantics=("parallel",),
            vmem_limit_bytes=vmem_limit,
        ),
        cost_estimate=pl.CostEstimate(
            flops=0, transcendentals=0,
            bytes_accessed=NC * (HW + OHOW) * itemsize),
    )(x.reshape(NC, H, W))
    return out3d.reshape(N, C, OH, OW)


# -----------------------------------------------------------------------------
# Reference + self-test.
# -----------------------------------------------------------------------------
def _reference_nearest(x: np.ndarray, size) -> np.ndarray:
    OH, OW = size
    H, W = x.shape[2], x.shape[3]
    iy = _nearest_src_indices(OH, H)
    ix = _nearest_src_indices(OW, W)
    return x[:, :, iy[:, None], ix[None, :]]


if __name__ == "__main__":
    key = jax.random.PRNGKey(0)
    N, C, H, W = 2, 4, 16, 16
    size = (32, 24)  # output spatial size of the ResizeLayer

    x = jax.random.normal(key, (N, C, H, W), dtype=jnp.float32)

    out = resize_layer(x, size)
    out = jax.block_until_ready(out)

    ref = _reference_nearest(np.asarray(x), size)
    assert out.shape == (N, C, size[0], size[1]), out.shape
    np.testing.assert_allclose(np.asarray(out), ref, rtol=1e-6, atol=1e-6)

    print("KERNEL_OK")
</pallas_src>

<mosaic_0001>
module attributes {stable_mosaic.version = 11 : i64} {
  func.func @kernel(%arg0: i32, %arg1: memref<8x256xf32, #tpu.memory_space<vmem>>, %arg2: memref<256x768xbf16, #tpu.memory_space<vmem>>, %arg3: memref<8x768xf32, #tpu.memory_space<vmem>>) attributes {dimension_semantics = [#tpu.dimension_semantics<parallel>], iteration_bounds = array<i64: 1>, scalar_prefetch = 0 : i64, scratch_operands = 0 : i64, tpu.core_type = #tpu.core_type<tc>, window_params = [{transform_indices = @transform_0, window_bounds = array<i64: 8, 256>}, {pipeline_mode = #tpu.pipeline_mode<synchronous>, transform_indices = @transform_1, window_bounds = array<i64: 256, 768>}, {transform_indices = @transform_2, window_bounds = array<i64: 8, 768>}]} {
    %c0 = arith.constant 0 : index
    %c0_0 = arith.constant 0 : index
    %0 = vector.load %arg2[%c0, %c0_0] : memref<256x768xbf16, #tpu.memory_space<vmem>>, vector<256x768xbf16>
    %c0_1 = arith.constant 0 : index
    %c0_2 = arith.constant 0 : index
    %1 = vector.load %arg1[%c0_1, %c0_2] : memref<8x256xf32, #tpu.memory_space<vmem>>, vector<8x256xf32>
    %2 = arith.truncf %1 : vector<8x256xf32> to vector<8x256xbf16>
    %3 = arith.extf %2 : vector<8x256xbf16> to vector<8x256xf32>
    %4 = arith.subf %1, %3 : vector<8x256xf32>
    %5 = arith.truncf %4 : vector<8x256xf32> to vector<8x256xbf16>
    %6 = arith.extf %5 : vector<8x256xbf16> to vector<8x256xf32>
    %7 = arith.subf %4, %6 : vector<8x256xf32>
    %8 = arith.truncf %7 : vector<8x256xf32> to vector<8x256xbf16>
    %cst = arith.constant dense<0.000000e+00> : vector<8x768xf32>
    %9 = tpu.matmul %2, %0, %cst {dimension_numbers = #tpu.dot_dimension_numbers<[1], [0], [0], [1], [0, 0, 1, 1], [], []>} : vector<8x256xbf16>, vector<256x768xbf16>, vector<8x768xf32> -> vector<8x768xf32>
    %cst_3 = arith.constant dense<0.000000e+00> : vector<8x768xf32>
    %10 = tpu.matmul %5, %0, %cst_3 {dimension_numbers = #tpu.dot_dimension_numbers<[1], [0], [0], [1], [0, 0, 1, 1], [], []>} : vector<8x256xbf16>, vector<256x768xbf16>, vector<8x768xf32> -> vector<8x768xf32>
    %11 = arith.addf %9, %10 : vector<8x768xf32>
    %cst_4 = arith.constant dense<0.000000e+00> : vector<8x768xf32>
    %12 = tpu.matmul %8, %0, %cst_4 {dimension_numbers = #tpu.dot_dimension_numbers<[1], [0], [0], [1], [0, 0, 1, 1], [], []>} : vector<8x256xbf16>, vector<256x768xbf16>, vector<8x768xf32> -> vector<8x768xf32>
    %13 = arith.addf %11, %12 : vector<8x768xf32>
    %c0_5 = arith.constant 0 : index
    %c0_6 = arith.constant 0 : index
    %14 = vector.load %arg3[%c0_5, %c0_6] : memref<8x768xf32, #tpu.memory_space<vmem>>, vector<8x768xf32>
    tpu.vector_store %arg3[%c0_5, %c0_6], %13 {strides = array<i32>} : memref<8x768xf32, #tpu.memory_space<vmem>>, vector<8x768xf32>,
    return
  }
  func.func @transform_0(%arg0: i32) -> (i32, i32) {
    %c0_i32 = arith.constant 0 : i32
    %c0_i32_0 = arith.constant 0 : i32
    return %arg0, %c0_i32 : i32, i32
  }
  func.func @transform_1(%arg0: i32) -> (i32, i32) {
    %c0_i32 = arith.constant 0 : i32
    %c0_i32_0 = arith.constant 0 : i32
    %c0_i32_1 = arith.constant 0 : i32
    return %c0_i32, %c0_i32_0 : i32, i32
  }
  func.func @transform_2(%arg0: i32) -> (i32, i32) {
    %c0_i32 = arith.constant 0 : i32
    %c0_i32_0 = arith.constant 0 : i32
    return %arg0, %c0_i32 : i32, i32
  }
}

</mosaic_0001>

<llo_original>
// kernel: tpu_custom_call.1
$region0: #{tpu_custom_call.1}
  #allocation0 [shape = 'u32[]', space=smem, size = 0x4, offset = 0x4, fixed_abs, tag = 'smem constant byte address 0x4 - core index']
  #allocation1 [shape = 'u32[144,128]{1,0:T(1,128)}', space=vmem, size = 0x12000, scoped, tag = 'internal scratch']
  %s0 = inlined_call_operand.hbm [shape: f32[8,256], index: 0, kind: input, shape index: {}]
  %s1 = inlined_call_operand.hbm [shape: bf16[256,768], index: 1, kind: input, shape index: {}]
  %s2 = inlined_call_operand.hbm [shape: f32[8,768], index: 2, kind: output, shape index: {}]
  %s3 = sld [smem:[#allocation0]]
  $region26: #{tpu_custom_call.1} parent=0
    _
  %s5 = ssub.s32 1, %s3
  %s6 = scalar_select 0, %s5, %s3
  $region1: #{tpu_custom_call.1} parent=0
    #allocation2 [shape = 'u8[8192]{0}', space=vmem, size = 0x2000, scoped, tag = 'input window, operand 0, single buffered']
    #allocation3 [shape = 's32[1]{0}', space=sflag, size = 0x4, scoped, tag = 'scoped memory for tpu_custom_call.1']
    #allocation4 [shape = 's32[1]{0}', space=sflag, size = 0x4, scoped, tag = 'scoped memory for tpu_custom_call.1']
    #allocation5 [shape = 'u8[393216]{0}', space=vmem, size = 0x60000, scoped, tag = 'input window, operand 1, single buffered']
    #allocation6 [shape = 's32[1]{0}', space=sflag, size = 0x4, scoped, tag = 'scoped memory for tpu_custom_call.1']
    #allocation7 [shape = 'u8[24576]{0}', space=vmem, size = 0x6000, scoped, tag = 'output window, operand 0, single buffered']
    %7 = vsyncpa [#allocation3], 0
    %8 = vsyncpa [#allocation6], 0
    %9 = vsyncpa [#allocation4], 0
    // Predicated region
    $region2: #{tpu_custom_call.1} parent=1 // pred_check
      _
    $region3: #{tpu_custom_call.1} parent=1 // pred_check_branch
      %11 = sbr.rel (0) target = $region5
    $region4: #{tpu_custom_call.1} parent=1 // pred_region
      %s13 = ssub.s32 256, 256
      %14 = vsyncadd [#allocation3], %s13
      %s16 = sshll.u32 [#allocation2], 4
      %s17 = int_to_ptr.vmem [resolvable:$true] %s16
      %19 = dma.hbm_to_vmem [thread:$0]  %s0, 256, %s17, [#allocation3]
    $region5: #{tpu_custom_call.1} parent=1 // pred_fallthru
      _
    // Predicated region
    $region6: #{tpu_custom_call.1} parent=1 // pred_check
      _
    $region7: #{tpu_custom_call.1} parent=1 // pred_check_branch
      %21 = sbr.rel (0) target = $region9
    $region8: #{tpu_custom_call.1} parent=1 // pred_region
      %s23 = ssub.s32 12288, 12288
      %24 = vsyncadd [#allocation6], %s23
      %s25 = sshll.u32 [#allocation5], 4
      %s26 = int_to_ptr.vmem [resolvable:$true] %s25
      %31 = dma.hbm_to_vmem [thread:$0]  %s1, 12288, %s26, [#allocation6], 384, 384, 24
    $region9: #{tpu_custom_call.1} parent=1 // pred_fallthru
      _
    // Predicated region
    $region10: #{tpu_custom_call.1} parent=1 // pred_check
      _
    $region11: #{tpu_custom_call.1} parent=1 // pred_check_branch
      %33 = sbr.rel (0) target = $region13
    $region12: #{tpu_custom_call.1} parent=1 // pred_region
      %34 = dma.done [#allocation3], 256
    $region13: #{tpu_custom_call.1} parent=1 // pred_fallthru
      _
    // Predicated region
    $region14: #{tpu_custom_call.1} parent=1 // pred_check
      _
    $region15: #{tpu_custom_call.1} parent=1 // pred_check_branch
      %36 = sbr.rel (0) target = $region17
    $region16: #{tpu_custom_call.1} parent=1 // pred_region
      %37 = dma.done [#allocation6], 12288
    $region17: #{tpu_custom_call.1} parent=1 // pred_fallthru
      _
    %v38 = vld [vmem:[#allocation5] sm:$0xff]
    %v39 = vld [vmem:[#allocation5 + $0x8] sm:$0xff]
    %v40 = vld [vmem:[#allocation5 + $0x10] sm:$0xff]
    %v41 = vld [vmem:[#allocation5 + $0x18] sm:$0xff]
    %v42 = vld [vmem:[#allocation5 + $0x20] sm:$0xff]
    %v43 = vld [vmem:[#allocation5 + $0x28] sm:$0xff]
    %v44 = vld [vmem:[#allocation5 + $0x30] sm:$0xff]
    %v45 = vld [vmem:[#allocation5 + $0x38] sm:$0xff]
    %v46 = vld [vmem:[#allocation5 + $0x40] sm:$0xff]
    %v47 = vld [vmem:[#allocation5 + $0x48] sm:$0xff]
    %v48 = vld [vmem:[#allocation5 + $0x50] sm:$0xff]
    %v49 = vld [vmem:[#allocation5 + $0x58] sm:$0xff]
    %v50 = vld [vmem:[#allocation5 + $0x60] sm:$0xff]
    %v51 = vld [vmem:[#allocation5 + $0x68] sm:$0xff]
    %v52 = vld [vmem:[#allocation5 + $0x70] sm:$0xff]
    %v53 = vld [vmem:[#allocation5 + $0x78] sm:$0xff]
    %v54 = vld [vmem:[#allocation5 + $0x80] sm:$0xff]
    %v55 = vld [vmem:[#allocation5 + $0x88] sm:$0xff]
    %v56 = vld [vmem:[#allocation5 + $0x90] sm:$0xff]
    %v57 = vld [vmem:[#allocation5 + $0x98] sm:$0xff]
    %v58 = vld [vmem:[#allocation5 + $0xa0] sm:$0xff]
    %v59 = vld [vmem:[#allocation5 + $0xa8] sm:$0xff]
    %v60 = vld [vmem:[#allocation5 + $0xb0] sm:$0xff]
    %v61 = vld [vmem:[#allocation5 + $0xb8] sm:$0xff]
    %v62 = vld [vmem:[#allocation5 + $0xc0] sm:$0xff]
    %v63 = vld [vmem:[#allocation5 + $0xc8] sm:$0xff]
    %v64 = vld [vmem:[#allocation5 + $0xd0] sm:$0xff]
    %v65 = vld [vmem:[#allocation5 + $0xd8] sm:$0xff]
    %v66 = vld [vmem:[#allocation5 + $0xe0] sm:$0xff]
    %v67 = vld [vmem:[#allocation5 + $0xe8] sm:$0xff]
    %v68 = vld [vmem:[#allocation5 + $0xf0] sm:$0xff]
    %v69 = vld [vmem:[#allocation5 + $0xf8] sm:$0xff]
    %v70 = vld [vmem:[#allocation5 + $0x100] sm:$0xff]
    %v71 = vld [vmem:[#allocation5 + $0x108] sm:$0xff]
    %v72 = vld [vmem:[#allocation5 + $0x110] sm:$0xff]
    %v73 = vld [vmem:[#allocation5 + $0x118] sm:$0xff]
    %v74 = vld [vmem:[#allocation5 + $0x120] sm:$0xff]
    %v75 = vld [vmem:[#allocation5 + $0x128] sm:$0xff]
    %v76 = vld [vmem:[#allocation5 + $0x130] sm:$0xff]
    %v77 = vld [vmem:[#allocation5 + $0x138] sm:$0xff]
    %v78 = vld [vmem:[#allocation5 + $0x140] sm:$0xff]
    %v79 = vld [vmem:[#allocation5 + $0x148] sm:$0xff]
    %v80 = vld [vmem:[#allocation5 + $0x150] sm:$0xff]
    %v81 = vld [vmem:[#allocation5 + $0x158] sm:$0xff]
    %v82 = vld [vmem:[#allocation5 + $0x160] sm:$0xff]
    %v83 = vld [vmem:[#allocation5 + $0x168] sm:$0xff]
    %v84 = vld [vmem:[#allocation5 + $0x170] sm:$0xff]
    %v85 = vld [vmem:[#allocation5 + $0x178] sm:$0xff]
    %v86 = vld [vmem:[#allocation5 + $0x180] sm:$0xff]
    %v87 = vld [vmem:[#allocation5 + $0x188] sm:$0xff]
    %v88 = vld [vmem:[#allocation5 + $0x190] sm:$0xff]
    %v89 = vld [vmem:[#allocation5 + $0x198] sm:$0xff]
    %v90 = vld [vmem:[#allocation5 + $0x1a0] sm:$0xff]
    %v91 = vld [vmem:[#allocation5 + $0x1a8] sm:$0xff]
    %v92 = vld [vmem:[#allocation5 + $0x1b0] sm:$0xff]
    %v93 = vld [vmem:[#allocation5 + $0x1b8] sm:$0xff]
    %v94 = vld [vmem:[#allocation5 + $0x1c0] sm:$0xff]
    %v95 = vld [vmem:[#allocation5 + $0x1c8] sm:$0xff]
    %v96 = vld [vmem:[#allocation5 + $0x1d0] sm:$0xff]
    %v97 = vld [vmem:[#allocation5 + $0x1d8] sm:$0xff]
    %v98 = vld [vmem:[#allocation5 + $0x1e0] sm:$0xff]
    %v99 = vld [vmem:[#allocation5 + $0x1e8] sm:$0xff]
    %v100 = vld [vmem:[#allocation5 + $0x1f0] sm:$0xff]
    %v101 = vld [vmem:[#allocation5 + $0x1f8] sm:$0xff]
    %v102 = vld [vmem:[#allocation5 + $0x200] sm:$0xff]
    %v103 = vld [vmem:[#allocation5 + $0x208] sm:$0xff]
    %v104 = vld [vmem:[#allocation5 + $0x210] sm:$0xff]
    %v105 = vld [vmem:[#allocation5 + $0x218] sm:$0xff]
    %v106 = vld [vmem:[#allocation5 + $0x220] sm:$0xff]
    %v107 = vld [vmem:[#allocation5 + $0x228] sm:$0xff]
    %v108 = vld [vmem:[#allocation5 + $0x230] sm:$0xff]
    %v109 = vld [vmem:[#allocation5 + $0x238] sm:$0xff]
    %v110 = vld [vmem:[#allocation5 + $0x240] sm:$0xff]
    %v111 = vld [vmem:[#allocation5 + $0x248] sm:$0xff]
    %v112 = vld [vmem:[#allocation5 + $0x250] sm:$0xff]
    %v113 = vld [vmem:[#allocation5 + $0x258] sm:$0xff]
    %v114 = vld [vmem:[#allocation5 + $0x260] sm:$0xff]
    %v115 = vld [vmem:[#allocation5 + $0x268] sm:$0xff]
    %v116 = vld [vmem:[#allocation5 + $0x270] sm:$0xff]
    %v117 = vld [vmem:[#allocation5 + $0x278] sm:$0xff]
    %v118 = vld [vmem:[#allocation5 + $0x280] sm:$0xff]
    %v119 = vld [vmem:[#allocation5 + $0x288] sm:$0xff]
    %v120 = vld [vmem:[#allocation5 + $0x290] sm:$0xff]
    %v121 = vld [vmem:[#allocation5 + $0x298] sm:$0xff]
    %v122 = vld [vmem:[#allocation5 + $0x2a0] sm:$0xff]
    %v123 = vld [vmem:[#allocation5 + $0x2a8] sm:$0xff]
    %v124 = vld [vmem:[#allocation5 + $0x2b0] sm:$0xff]
    %v125 = vld [vmem:[#allocation5 + $0x2b8] sm:$0xff]
    %v126 = vld [vmem:[#allocation5 + $0x2c0] sm:$0xff]
    %v127 = vld [vmem:[#allocation5 + $0x2c8] sm:$0xff]
    %v128 = vld [vmem:[#allocation5 + $0x2d0] sm:$0xff]
    %v129 = vld [vmem:[#allocation5 + $0x2d8] sm:$0xff]
    %v130 = vld [vmem:[#allocation5 + $0x2e0] sm:$0xff]
    %v131 = vld [vmem:[#allocation5 + $0x2e8] sm:$0xff]
    %v132 = vld [vmem:[#allocation5 + $0x2f0] sm:$0xff]
    %v133 = vld [vmem:[#allocation5 + $0x2f8] sm:$0xff]
    %v134 = vld [vmem:[#allocation2] sm:$0xff]
    %v135 = vld [vmem:[#allocation2 + $0x8] sm:$0xff]
    %v136 = vpack.c.bf16 %v134, %v134
    %v137 = vpack.c.bf16 %v135, %v135
    %v138 = vunpack.c.l.bf16 %v136
    %v139 = vunpack.c.l.bf16 %v137
    %v140 = vsub.f32 %v134, %v138
    %v141 = vsub.f32 %v135, %v139
    %v142 = vpack.c.bf16 %v140, %v140
    %v143 = vpack.c.bf16 %v141, %v141
    %v144 = vunpack.c.l.bf16 %v142
    %v145 = vunpack.c.l.bf16 %v143
    %v146 = vsub.f32 %v140, %v144
    %v147 = vsub.f32 %v141, %v145
    %v148 = vpack.c.bf16 %v146, %v146
    %v149 = vpack.c.bf16 %v147, %v147
    %v246 = vunpack.c.l.b16 %v38
    %v247 = vunpack.c.h.b16 %v38
    %v248 = vunpack.c.l.b16 %v39
    %v249 = vunpack.c.h.b16 %v39
    %v250 = vunpack.c.l.b16 %v40
    %v251 = vunpack.c.h.b16 %v40
    %v252 = vunpack.c.l.b16 %v41
    %v253 = vunpack.c.h.b16 %v41
    %v254 = vunpack.c.l.b16 %v42
    %v255 = vunpack.c.h.b16 %v42
    %v256 = vunpack.c.l.b16 %v43
    %v257 = vunpack.c.h.b16 %v43
    %v258 = vunpack.c.l.b16 %v44
    %v259 = vunpack.c.h.b16 %v44
    %v260 = vunpack.c.l.b16 %v45
    %v261 = vunpack.c.h.b16 %v45
    %v262 = vunpack.c.l.b16 %v46
    %v263 = vunpack.c.h.b16 %v46
    %v264 = vunpack.c.l.b16 %v47
    %v265 = vunpack.c.h.b16 %v47
    %v266 = vunpack.c.l.b16 %v48
    %v267 = vunpack.c.h.b16 %v48
    %v268 = vunpack.c.l.b16 %v49
    %v269 = vunpack.c.h.b16 %v49
    %v270 = vunpack.c.l.b16 %v50
    %v271 = vunpack.c.h.b16 %v50
    %v272 = vunpack.c.l.b16 %v51
    %v273 = vunpack.c.h.b16 %v51
    %v274 = vunpack.c.l.b16 %v52
    %v275 = vunpack.c.h.b16 %v52
    %v276 = vunpack.c.l.b16 %v53
    %v277 = vunpack.c.h.b16 %v53
    %v278 = vunpack.c.l.b16 %v54
    %v279 = vunpack.c.h.b16 %v54
    %v280 = vunpack.c.l.b16 %v55
    %v281 = vunpack.c.h.b16 %v55
    %v282 = vunpack.c.l.b16 %v56
    %v283 = vunpack.c.h.b16 %v56
    %v284 = vunpack.c.l.b16 %v57
    %v285 = vunpack.c.h.b16 %v57
    %v286 = vunpack.c.l.b16 %v58
    %v287 = vunpack.c.h.b16 %v58
    %v288 = vunpack.c.l.b16 %v59
    %v289 = vunpack.c.h.b16 %v59
    %v290 = vunpack.c.l.b16 %v60
    %v291 = vunpack.c.h.b16 %v60
    %v292 = vunpack.c.l.b16 %v61
    %v293 = vunpack.c.h.b16 %v61
    %v294 = vunpack.c.l.b16 %v62
    %v295 = vunpack.c.h.b16 %v62
    %v296 = vunpack.c.l.b16 %v63
    %v297 = vunpack.c.h.b16 %v63
    %v298 = vunpack.c.l.b16 %v64
    %v299 = vunpack.c.h.b16 %v64
    %v300 = vunpack.c.l.b16 %v65
    %v301 = vunpack.c.h.b16 %v65
    %v302 = vunpack.c.l.b16 %v66
    %v303 = vunpack.c.h.b16 %v66
    %v304 = vunpack.c.l.b16 %v67
    %v305 = vunpack.c.h.b16 %v67
    %v306 = vunpack.c.l.b16 %v68
    %v307 = vunpack.c.h.b16 %v68
    %v308 = vunpack.c.l.b16 %v69
    %v309 = vunpack.c.h.b16 %v69
    %v310 = vunpack.c.l.b16 %v70
    %v311 = vunpack.c.h.b16 %v70
    %v312 = vunpack.c.l.b16 %v71
    %v313 = vunpack.c.h.b16 %v71
    %v314 = vunpack.c.l.b16 %v72
    %v315 = vunpack.c.h.b16 %v72
    %v316 = vunpack.c.l.b16 %v73
    %v317 = vunpack.c.h.b16 %v73
    %v318 = vunpack.c.l.b16 %v74
    %v319 = vunpack.c.h.b16 %v74
    %v320 = vunpack.c.l.b16 %v75
    %v321 = vunpack.c.h.b16 %v75
    %v322 = vunpack.c.l.b16 %v76
    %v323 = vunpack.c.h.b16 %v76
    %v324 = vunpack.c.l.b16 %v77
    %v325 = vunpack.c.h.b16 %v77
    %v326 = vunpack.c.l.b16 %v78
    %v327 = vunpack.c.h.b16 %v78
    %v328 = vunpack.c.l.b16 %v79
    %v329 = vunpack.c.h.b16 %v79
    %v330 = vunpack.c.l.b16 %v80
    %v331 = vunpack.c.h.b16 %v80
    %v332 = vunpack.c.l.b16 %v81
    %v333 = vunpack.c.h.b16 %v81
    %v334 = vunpack.c.l.b16 %v82
    %v335 = vunpack.c.h.b16 %v82
    %v336 = vunpack.c.l.b16 %v83
    %v337 = vunpack.c.h.b16 %v83
    %v338 = vunpack.c.l.b16 %v84
    %v339 = vunpack.c.h.b16 %v84
    %v340 = vunpack.c.l.b16 %v85
    %v341 = vunpack.c.h.b16 %v85
    %v342 = vunpack.c.l.b16 %v86
    %v343 = vunpack.c.h.b16 %v86
    %v344 = vunpack.c.l.b16 %v87
    %v345 = vunpack.c.h.b16 %v87
    %v346 = vunpack.c.l.b16 %v88
    %v347 = vunpack.c.h.b16 %v88
    %v348 = vunpack.c.l.b16 %v89
    %v349 = vunpack.c.h.b16 %v89
    %v350 = vunpack.c.l.b16 %v90
    %v351 = vunpack.c.h.b16 %v90
    %v352 = vunpack.c.l.b16 %v91
    %v353 = vunpack.c.h.b16 %v91
    %v354 = vunpack.c.l.b16 %v92
    %v355 = vunpack.c.h.b16 %v92
    %v356 = vunpack.c.l.b16 %v93
    %v357 = vunpack.c.h.b16 %v93
    %v358 = vunpack.c.l.b16 %v94
    %v359 = vunpack.c.h.b16 %v94
    %v360 = vunpack.c.l.b16 %v95
    %v361 = vunpack.c.h.b16 %v95
    %v362 = vunpack.c.l.b16 %v96
    %v363 = vunpack.c.h.b16 %v96
    %v364 = vunpack.c.l.b16 %v97
    %v365 = vunpack.c.h.b16 %v97
    %v366 = vunpack.c.l.b16 %v98
    %v367 = vunpack.c.h.b16 %v98
    %v368 = vunpack.c.l.b16 %v99
    %v369 = vunpack.c.h.b16 %v99
    %v370 = vunpack.c.l.b16 %v100
    %v371 = vunpack.c.h.b16 %v100
    %v372 = vunpack.c.l.b16 %v101
    %v373 = vunpack.c.h.b16 %v101
    %v374 = vunpack.c.l.b16 %v102
    %v375 = vunpack.c.h.b16 %v102
    %v376 = vunpack.c.l.b16 %v103
    %v377 = vunpack.c.h.b16 %v103
    %v378 = vunpack.c.l.b16 %v104
    %v379 = vunpack.c.h.b16 %v104
    %v380 = vunpack.c.l.b16 %v105
    %v381 = vunpack.c.h.b16 %v105
    %v382 = vunpack.c.l.b16 %v106
    %v383 = vunpack.c.h.b16 %v106
    %v384 = vunpack.c.l.b16 %v107
    %v385 = vunpack.c.h.b16 %v107
    %v386 = vunpack.c.l.b16 %v108
    %v387 = vunpack.c.h.b16 %v108
    %v388 = vunpack.c.l.b16 %v109
    %v389 = vunpack.c.h.b16 %v109
    %v390 = vunpack.c.l.b16 %v110
    %v391 = vunpack.c.h.b16 %v110
    %v392 = vunpack.c.l.b16 %v111
    %v393 = vunpack.c.h.b16 %v111
    %v394 = vunpack.c.l.b16 %v112
    %v395 = vunpack.c.h.b16 %v112
    %v396 = vunpack.c.l.b16 %v113
    %v397 = vunpack.c.h.b16 %v113
    %v398 = vunpack.c.l.b16 %v114
    %v399 = vunpack.c.h.b16 %v114
    %v400 = vunpack.c.l.b16 %v115
    %v401 = vunpack.c.h.b16 %v115
    %v402 = vunpack.c.l.b16 %v116
    %v403 = vunpack.c.h.b16 %v116
    %v404 = vunpack.c.l.b16 %v117
    %v405 = vunpack.c.h.b16 %v117
    %v406 = vunpack.c.l.b16 %v118
    %v407 = vunpack.c.h.b16 %v118
    %v408 = vunpack.c.l.b16 %v119
    %v409 = vunpack.c.h.b16 %v119
    %v410 = vunpack.c.l.b16 %v120
    %v411 = vunpack.c.h.b16 %v120
    %v412 = vunpack.c.l.b16 %v121
    %v413 = vunpack.c.h.b16 %v121
    %v414 = vunpack.c.l.b16 %v122
    %v415 = vunpack.c.h.b16 %v122
    %v416 = vunpack.c.l.b16 %v123
    %v417 = vunpack.c.h.b16 %v123
    %v418 = vunpack.c.l.b16 %v124
    %v419 = vunpack.c.h.b16 %v124
    %v420 = vunpack.c.l.b16 %v125
    %v421 = vunpack.c.h.b16 %v125
    %v422 = vunpack.c.l.b16 %v126
    %v423 = vunpack.c.h.b16 %v126
    %v424 = vunpack.c.l.b16 %v127
    %v425 = vunpack.c.h.b16 %v127
    %v426 = vunpack.c.l.b16 %v128
    %v427 = vunpack.c.h.b16 %v128
    %v428 = vunpack.c.l.b16 %v129
    %v429 = vunpack.c.h.b16 %v129
    %v430 = vunpack.c.l.b16 %v130
    %v431 = vunpack.c.h.b16 %v130
    %v432 = vunpack.c.l.b16 %v131
    %v433 = vunpack.c.h.b16 %v131
    %v434 = vunpack.c.l.b16 %v132
    %v435 = vunpack.c.h.b16 %v132
    %v436 = vunpack.c.l.b16 %v133
    %v437 = vunpack.c.h.b16 %v133
    %v438 = vpack.c.b16 %v252, %v246
    %v439 = vpack.c.b16 %v253, %v247
    %v440 = vpack.c.b16 %v254, %v248
    %v441 = vpack.c.b16 %v255, %v249
    %v442 = vpack.c.b16 %v256, %v250
    %v443 = vpack.c.b16 %v257, %v251
    %v444 = vpack.c.b16 %v264, %v258
    %v445 = vpack.c.b16 %v265, %v259
    %v446 = vpack.c.b16 %v266, %v260
    %v447 = vpack.c.b16 %v267, %v261
    %v448 = vpack.c.b16 %v268, %v262
    %v449 = vpack.c.b16 %v269, %v263
    %v450 = vpack.c.b16 %v276, %v270
    %v451 = vpack.c.b16 %v277, %v271
    %v452 = vpack.c.b16 %v278, %v272
    %v453 = vpack.c.b16 %v279, %v273
    %v454 = vpack.c.b16 %v280, %v274
    %v455 = vpack.c.b16 %v281, %v275
    %v456 = vpack.c.b16 %v288, %v282
    %v457 = vpack.c.b16 %v289, %v283
    %v458 = vpack.c.b16 %v290, %v284
    %v459 = vpack.c.b16 %v291, %v285
    %v460 = vpack.c.b16 %v292, %v286
    %v461 = vpack.c.b16 %v293, %v287
    %v462 = vpack.c.b16 %v300, %v294
    %v463 = vpack.c.b16 %v301, %v295
    %v464 = vpack.c.b16 %v302, %v296
    %v465 = vpack.c.b16 %v303, %v297
    %v466 = vpack.c.b16 %v304, %v298
    %v467 = vpack.c.b16 %v305, %v299
    %v468 = vpack.c.b16 %v312, %v306
    %v469 = vpack.c.b16 %v313, %v307
    %v470 = vpack.c.b16 %v314, %v308
    %v471 = vpack.c.b16 %v315, %v309
    %v472 = vpack.c.b16 %v316, %v310
    %v473 = vpack.c.b16 %v317, %v311
    %v474 = vpack.c.b16 %v324, %v318
    %v475 = vpack.c.b16 %v325, %v319
    %v476 = vpack.c.b16 %v326, %v320
    %v477 = vpack.c.b16 %v327, %v321
    %v478 = vpack.c.b16 %v328, %v322
    %v479 = vpack.c.b16 %v329, %v323
    %v480 = vpack.c.b16 %v336, %v330
    %v481 = vpack.c.b16 %v337, %v331
    %v482 = vpack.c.b16 %v338, %v332
    %v483 = vpack.c.b16 %v339, %v333
    %v484 = vpack.c.b16 %v340, %v334
    %v485 = vpack.c.b16 %v341, %v335
    %v486 = vpack.c.b16 %v348, %v342
    %v487 = vpack.c.b16 %v349, %v343
    %v488 = vpack.c.b16 %v350, %v344
    %v489 = vpack.c.b16 %v351, %v345
    %v490 = vpack.c.b16 %v352, %v346
    %v491 = vpack.c.b16 %v353, %v347
    %v492 = vpack.c.b16 %v360, %v354
    %v493 = vpack.c.b16 %v361, %v355
    %v494 = vpack.c.b16 %v362, %v356
    %v495 = vpack.c.b16 %v363, %v357
    %v496 = vpack.c.b16 %v364, %v358
    %v497 = vpack.c.b16 %v365, %v359
    %v498 = vpack.c.b16 %v372, %v366
    %v499 = vpack.c.b16 %v373, %v367
    %v500 = vpack.c.b16 %v374, %v368
    %v501 = vpack.c.b16 %v375, %v369
    %v502 = vpack.c.b16 %v376, %v370
    %v503 = vpack.c.b16 %v377, %v371
    %v504 = vpack.c.b16 %v384, %v378
    %v505 = vpack.c.b16 %v385, %v379
    %v506 = vpack.c.b16 %v386, %v380
    %v507 = vpack.c.b16 %v387, %v381
    %v508 = vpack.c.b16 %v388, %v382
    %v509 = vpack.c.b16 %v389, %v383
    %v510 = vpack.c.b16 %v396, %v390
    %v511 = vpack.c.b16 %v397, %v391
    %v512 = vpack.c.b16 %v398, %v392
    %v513 = vpack.c.b16 %v399, %v393
    %v514 = vpack.c.b16 %v400, %v394
    %v515 = vpack.c.b16 %v401, %v395
    %v516 = vpack.c.b16 %v408, %v402
    %v517 = vpack.c.b16 %v409, %v403
    %v518 = vpack.c.b16 %v410, %v404
    %v519 = vpack.c.b16 %v411, %v405
    %v520 = vpack.c.b16 %v412, %v406
    %v521 = vpack.c.b16 %v413, %v407
    %v522 = vpack.c.b16 %v420, %v414
    %v523 = vpack.c.b16 %v421, %v415
    %v524 = vpack.c.b16 %v422, %v416
    %v525 = vpack.c.b16 %v423, %v417
    %v526 = vpack.c.b16 %v424, %v418
    %v527 = vpack.c.b16 %v425, %v419
    %v528 = vpack.c.b16 %v432, %v426
    %v529 = vpack.c.b16 %v433, %v427
    %v530 = vpack.c.b16 %v434, %v428
    %v531 = vpack.c.b16 %v435, %v429
    %v532 = vpack.c.b16 %v436, %v430
    %v533 = vpack.c.b16 %v437, %v431
    %630 = vmatprep.subr.bf16.mxu0 %v439
    %631 = vmatpush1.bf16.msra.mxu0 %v438
    %632 = vmatprep.subr.bf16.mxu0 %v445
    %633 = vmatpush1.bf16.msra.mxu0 %v444
    %634 = vmatprep.subr.bf16.mxu0 %v451
    %635 = vmatpush1.bf16.msra.mxu0 %v450
    %636 = vmatprep.subr.bf16.mxu0 %v457
    %637 = vmatpush1.bf16.msra.mxu0 %v456
    %638 = vmatprep.subr.bf16.mxu0 %v463
    %639 = vmatpush1.bf16.msra.mxu0 %v462
    %640 = vmatprep.subr.bf16.mxu0 %v469
    %641 = vmatpush1.bf16.msra.mxu0 %v468
    %642 = vmatprep.subr.bf16.mxu0 %v475
    %643 = vmatpush1.bf16.msra.mxu0 %v474
    %644 = vmatprep.subr.bf16.mxu0 %v481
    %645 = vmatpush1.bf16.msra.mxu0 %v480
    %646 = vmatprep.subr.bf16.mxu0 %v487
    %647 = vmatpush1.bf16.msra.mxu0 %v486
    %648 = vmatprep.subr.bf16.mxu0 %v493
    %649 = vmatpush1.bf16.msra.mxu0 %v492
    %650 = vmatprep.subr.bf16.mxu0 %v499
    %651 = vmatpush1.bf16.msra.mxu0 %v498
    %652 = vmatprep.subr.bf16.mxu0 %v505
    %653 = vmatpush1.bf16.msra.mxu0 %v504
    %654 = vmatprep.subr.bf16.mxu0 %v511
    %655 = vmatpush1.bf16.msra.mxu0 %v510
    %656 = vmatprep.subr.bf16.mxu0 %v517
    %657 = vmatpush1.bf16.msra.mxu0 %v516
    %658 = vmatprep.subr.bf16.mxu0 %v523
    %659 = vmatpush1.bf16.msra.mxu0 %v522
    %660 = vmatprep.subr.bf16.mxu0 %v529
    %661 = vmatpush1.bf16.msra.mxu0 %v528
    %662 = vmatprep.mubr.bf16.mxu0 %v143
    %663 = vmatmul.mubr.bf16.gmra.mrb[0].mxu0 %v142
    %v664 = vpop.f32.mrb[0].mxu0
    %v665 = vadd.f32 0.0, %v664
    %v666 = vpop.f32.mrb[0].mxu0
    %v667 = vadd.f32 0.0, %v666
    %v668 = vpop.f32.mrb[0].mxu0
    %v669 = vpop.f32.mrb[0].mxu0
    %670 = vdwg.mxu0
    %671 = vmatprep.subr.bf16.mxu0 %v441
    %672 = vmatpush1.bf16.msra.mxu0 %v440
    %673 = vmatprep.subr.bf16.mxu0 %v447
    %674 = vmatpush1.bf16.msra.mxu0 %v446
    %675 = vmatprep.subr.bf16.mxu0 %v453
    %676 = vmatpush1.bf16.msra.mxu0 %v452
    %677 = vmatprep.subr.bf16.mxu0 %v459
    %678 = vmatpush1.bf16.msra.mxu0 %v458
    %679 = vmatprep.subr.bf16.mxu0 %v465
    %680 = vmatpush1.bf16.msra.mxu0 %v464
    %681 = vmatprep.subr.bf16.mxu0 %v471
    %682 = vmatpush1.bf16.msra.mxu0 %v470
    %683 = vmatprep.subr.bf16.mxu0 %v477
    %684 = vmatpush1.bf16.msra.mxu0 %v476
    %685 = vmatprep.subr.bf16.mxu0 %v483
    %686 = vmatpush1.bf16.msra.mxu0 %v482
    %687 = vmatprep.subr.bf16.mxu0 %v489
    %688 = vmatpush1.bf16.msra.mxu0 %v488
    %689 = vmatprep.subr.bf16.mxu0 %v495
    %690 = vmatpush1.bf16.msra.mxu0 %v494
    %691 = vmatprep.subr.bf16.mxu0 %v501
    %692 = vmatpush1.bf16.msra.mxu0 %v500
    %693 = vmatprep.subr.bf16.mxu0 %v507
    %694 = vmatpush1.bf16.msra.mxu0 %v506
    %695 = vmatprep.subr.bf16.mxu0 %v513
    %696 = vmatpush1.bf16.msra.mxu0 %v512
    %697 = vmatprep.subr.bf16.mxu0 %v519
    %698 = vmatpush1.bf16.msra.mxu0 %v518
    %699 = vmatprep.subr.bf16.mxu0 %v525
    %700 = vmatpush1.bf16.msra.mxu0 %v524
    %701 = vmatprep.subr.bf16.mxu0 %v531
    %702 = vmatpush1.bf16.msra.mxu0 %v530
    %703 = vmatprep.mubr.bf16.mxu0 %v143
    %704 = vmatmul.mubr.bf16.gmra.mrb[0].mxu0 %v142
    %v705 = vpop.f32.mrb[0].mxu0
    %v706 = vadd.f32 0.0, %v705
    %v707 = vpop.f32.mrb[0].mxu0
    %v708 = vadd.f32 0.0, %v707
    %v709 = vpop.f32.mrb[0].mxu0
    %v710 = vpop.f32.mrb[0].mxu0
    %711 = vdwg.mxu0
    %712 = vmatprep.subr.bf16.mxu0 %v443
    %713 = vmatpush1.bf16.msra.mxu0 %v442
    %714 = vmatprep.subr.bf16.mxu0 %v449
    %715 = vmatpush1.bf16.msra.mxu0 %v448
    %716 = vmatprep.subr.bf16.mxu0 %v455
    %717 = vmatpush1.bf16.msra.mxu0 %v454
    %718 = vmatprep.subr.bf16.mxu0 %v461
    %719 = vmatpush1.bf16.msra.mxu0 %v460
    %720 = vmatprep.subr.bf16.mxu0 %v467
    %721 = vmatpush1.bf16.msra.mxu0 %v466
    %722 = vmatprep.subr.bf16.mxu0 %v473
    %723 = vmatpush1.bf16.msra.mxu0 %v472
    %724 = vmatprep.subr.bf16.mxu0 %v479
    %725 = vmatpush1.bf16.msra.mxu0 %v478
    %726 = vmatprep.subr.bf16.mxu0 %v485
    %727 = vmatpush1.bf16.msra.mxu0 %v484
    %728 = vmatprep.subr.bf16.mxu0 %v491
    %729 = vmatpush1.bf16.msra.mxu0 %v490
    %730 = vmatprep.subr.bf16.mxu0 %v497
    %731 = vmatpush1.bf16.msra.mxu0 %v496
    %732 = vmatprep.subr.bf16.mxu0 %v503
    %733 = vmatpush1.bf16.msra.mxu0 %v502
    %734 = vmatprep.subr.bf16.mxu0 %v509
    %735 = vmatpush1.bf16.msra.mxu0 %v508
    %736 = vmatprep.subr.bf16.mxu0 %v515
    %737 = vmatpush1.bf16.msra.mxu0 %v514
    %738 = vmatprep.subr.bf16.mxu0 %v521
    %739 = vmatpush1.bf16.msra.mxu0 %v520
    %740 = vmatprep.subr.bf16.mxu0 %v527
    %741 = vmatpush1.bf16.msra.mxu0 %v526
    %742 = vmatprep.subr.bf16.mxu0 %v533
    %743 = vmatpush1.bf16.msra.mxu0 %v532
    %744 = vmatprep.mubr.bf16.mxu0 %v143
    %745 = vmatmul.mubr.bf16.gmra.mrb[0].mxu0 %v142
    %v746 = vpop.f32.mrb[0].mxu0
    %v747 = vadd.f32 0.0, %v746
    %v748 = vpop.f32.mrb[0].mxu0
    %v749 = vadd.f32 0.0, %v748
    %v750 = vpop.f32.mrb[0].mxu0
    %v751 = vpop.f32.mrb[0].mxu0
    %752 = vdwg.mxu0
    %753 = vmatprep.subr.bf16.mxu0 %v439
    %754 = vmatpush1.bf16.msra.mxu0 %v438
    %755 = vmatprep.subr.bf16.mxu0 %v445
    %756 = vmatpush1.bf16.msra.mxu0 %v444
    %757 = vmatprep.subr.bf16.mxu0 %v451
    %758 = vmatpush1.bf16.msra.mxu0 %v450
    %759 = vmatprep.subr.bf16.mxu0 %v457
    %760 = vmatpush1.bf16.msra.mxu0 %v456
    %761 = vmatprep.subr.bf16.mxu0 %v463
    %762 = vmatpush1.bf16.msra.mxu0 %v462
    %763 = vmatprep.subr.bf16.mxu0 %v469
    %764 = vmatpush1.bf16.msra.mxu0 %v468
    %765 = vmatprep.subr.bf16.mxu0 %v475
    %766 = vmatpush1.bf16.msra.mxu0 %v474
    %767 = vmatprep.subr.bf16.mxu0 %v481
    %768 = vmatpush1.bf16.msra.mxu0 %v480
    %769 = vmatprep.subr.bf16.mxu0 %v487
    %770 = vmatpush1.bf16.msra.mxu0 %v486
    %771 = vmatprep.subr.bf16.mxu0 %v493
    %772 = vmatpush1.bf16.msra.mxu0 %v492
    %773 = vmatprep.subr.bf16.mxu0 %v499
    %774 = vmatpush1.bf16.msra.mxu0 %v498
    %775 = vmatprep.subr.bf16.mxu0 %v505
    %776 = vmatpush1.bf16.msra.mxu0 %v504
    %777 = vmatprep.subr.bf16.mxu0 %v511
    %778 = vmatpush1.bf16.msra.mxu0 %v510
    %779 = vmatprep.subr.bf16.mxu0 %v517
    %780 = vmatpush1.bf16.msra.mxu0 %v516
    %781 = vmatprep.subr.bf16.mxu0 %v523
    %782 = vmatpush1.bf16.msra.mxu0 %v522
    %783 = vmatprep.subr.bf16.mxu0 %v529
    %784 = vmatpush1.bf16.msra.mxu0 %v528
    %785 = vmatprep.mubr.bf16.mxu0 %v137
    %786 = vmatmul.mubr.bf16.gmra.mrb[0].mxu0 %v136
    %v787 = vpop.f32.mrb[0].mxu0
    %v788 = vadd.f32 %v665, %v787
    %v789 = vpop.f32.mrb[0].mxu0
    %v790 = vadd.f32 %v667, %v789
    %v791 = vpop.f32.mrb[0].mxu0
    %v792 = vpop.f32.mrb[0].mxu0
    %793 = vdwg.mxu0
    %794 = vmatprep.subr.bf16.mxu0 %v441
    %795 = vmatpush1.bf16.msra.mxu0 %v440
    %796 = vmatprep.subr.bf16.mxu0 %v447
    %797 = vmatpush1.bf16.msra.mxu0 %v446
    %798 = vmatprep.subr.bf16.mxu0 %v453
    %799 = vmatpush1.bf16.msra.mxu0 %v452
    %800 = vmatprep.subr.bf16.mxu0 %v459
    %801 = vmatpush1.bf16.msra.mxu0 %v458
    %802 = vmatprep.subr.bf16.mxu0 %v465
    %803 = vmatpush1.bf16.msra.mxu0 %v464
    %804 = vmatprep.subr.bf16.mxu0 %v471
    %805 = vmatpush1.bf16.msra.mxu0 %v470
    %806 = vmatprep.subr.bf16.mxu0 %v477
    %807 = vmatpush1.bf16.msra.mxu0 %v476
    %808 = vmatprep.subr.bf16.mxu0 %v483
    %809 = vmatpush1.bf16.msra.mxu0 %v482
    %810 = vmatprep.subr.bf16.mxu0 %v489
    %811 = vmatpush1.bf16.msra.mxu0 %v488
    %812 = vmatprep.subr.bf16.mxu0 %v495
    %813 = vmatpush1.bf16.msra.mxu0 %v494
    %814 = vmatprep.subr.bf16.mxu0 %v501
    %815 = vmatpush1.bf16.msra.mxu0 %v500
    %816 = vmatprep.subr.bf16.mxu0 %v507
    %817 = vmatpush1.bf16.msra.mxu0 %v506
    %818 = vmatprep.subr.bf16.mxu0 %v513
    %819 = vmatpush1.bf16.msra.mxu0 %v512
    %820 = vmatprep.subr.bf16.mxu0 %v519
    %821 = vmatpush1.bf16.msra.mxu0 %v518
    %822 = vmatprep.subr.bf16.mxu0 %v525
    %823 = vmatpush1.bf16.msra.mxu0 %v524
    %824 = vmatprep.subr.bf16.mxu0 %v531
    %825 = vmatpush1.bf16.msra.mxu0 %v530
    %826 = vmatprep.mubr.bf16.mxu0 %v137
    %827 = vmatmul.mubr.bf16.gmra.mrb[0].mxu0 %v136
    %v828 = vpop.f32.mrb[0].mxu0
    %v829 = vadd.f32 %v706, %v828
    %v830 = vpop.f32.mrb[0].mxu0
    %v831 = vadd.f32 %v708, %v830
    %v832 = vpop.f32.mrb[0].mxu0
    %v833 = vpop.f32.mrb[0].mxu0
    %834 = vdwg.mxu0
    %835 = vmatprep.subr.bf16.mxu0 %v443
    %836 = vmatpush1.bf16.msra.mxu0 %v442
    %837 = vmatprep.subr.bf16.mxu0 %v449
    %838 = vmatpush1.bf16.msra.mxu0 %v448
    %839 = vmatprep.subr.bf16.mxu0 %v455
    %840 = vmatpush1.bf16.msra.mxu0 %v454
    %841 = vmatprep.subr.bf16.mxu0 %v461
    %842 = vmatpush1.bf16.msra.mxu0 %v460
    %843 = vmatprep.subr.bf16.mxu0 %v467
    %844 = vmatpush1.bf16.msra.mxu0 %v466
    %845 = vmatprep.subr.bf16.mxu0 %v473
    %846 = vmatpush1.bf16.msra.mxu0 %v472
    %847 = vmatprep.subr.bf16.mxu0 %v479
    %848 = vmatpush1.bf16.msra.mxu0 %v478
    %849 = vmatprep.subr.bf16.mxu0 %v485
    %850 = vmatpush1.bf16.msra.mxu0 %v484
    %851 = vmatprep.subr.bf16.mxu0 %v491
    %852 = vmatpush1.bf16.msra.mxu0 %v490
    %853 = vmatprep.subr.bf16.mxu0 %v497
    %854 = vmatpush1.bf16.msra.mxu0 %v496
    %855 = vmatprep.subr.bf16.mxu0 %v503
    %856 = vmatpush1.bf16.msra.mxu0 %v502
    %857 = vmatprep.subr.bf16.mxu0 %v509
    %858 = vmatpush1.bf16.msra.mxu0 %v508
    %859 = vmatprep.subr.bf16.mxu0 %v515
    %860 = vmatpush1.bf16.msra.mxu0 %v514
    %861 = vmatprep.subr.bf16.mxu0 %v521
    %862 = vmatpush1.bf16.msra.mxu0 %v520
    %863 = vmatprep.subr.bf16.mxu0 %v527
    %864 = vmatpush1.bf16.msra.mxu0 %v526
    %865 = vmatprep.subr.bf16.mxu0 %v533
    %866 = vmatpush1.bf16.msra.mxu0 %v532
    %867 = vmatprep.mubr.bf16.mxu0 %v137
    %868 = vmatmul.mubr.bf16.gmra.mrb[0].mxu0 %v136
    %v869 = vpop.f32.mrb[0].mxu0
    %v870 = vadd.f32 %v747, %v869
    %v871 = vpop.f32.mrb[0].mxu0
    %v872 = vadd.f32 %v749, %v871
    %v873 = vpop.f32.mrb[0].mxu0
    %v874 = vpop.f32.mrb[0].mxu0
    %875 = vdwg.mxu0
    %876 = vmatprep.subr.bf16.mxu0 %v439
    %877 = vmatpush1.bf16.msra.mxu0 %v438
    %878 = vmatprep.subr.bf16.mxu0 %v445
    %879 = vmatpush1.bf16.msra.mxu0 %v444
    %880 = vmatprep.subr.bf16.mxu0 %v451
    %881 = vmatpush1.bf16.msra.mxu0 %v450
    %882 = vmatprep.subr.bf16.mxu0 %v457
    %883 = vmatpush1.bf16.msra.mxu0 %v456
    %884 = vmatprep.subr.bf16.mxu0 %v463
    %885 = vmatpush1.bf16.msra.mxu0 %v462
    %886 = vmatprep.subr.bf16.mxu0 %v469
    %887 = vmatpush1.bf16.msra.mxu0 %v468
    %888 = vmatprep.subr.bf16.mxu0 %v475
    %889 = vmatpush1.bf16.msra.mxu0 %v474
    %890 = vmatprep.subr.bf16.mxu0 %v481
    %891 = vmatpush1.bf16.msra.mxu0 %v480
    %892 = vmatprep.subr.bf16.mxu0 %v487
    %893 = vmatpush1.bf16.msra.mxu0 %v486
    %894 = vmatprep.subr.bf16.mxu0 %v493
    %895 = vmatpush1.bf16.msra.mxu0 %v492
    %896 = vmatprep.subr.bf16.mxu0 %v499
    %897 = vmatpush1.bf16.msra.mxu0 %v498
    %898 = vmatprep.subr.bf16.mxu0 %v505
    %899 = vmatpush1.bf16.msra.mxu0 %v504
    %900 = vmatprep.subr.bf16.mxu0 %v511
    %901 = vmatpush1.bf16.msra.mxu0 %v510
    %902 = vmatprep.subr.bf16.mxu0 %v517
    %903 = vmatpush1.bf16.msra.mxu0 %v516
    %904 = vmatprep.subr.bf16.mxu0 %v523
    %905 = vmatpush1.bf16.msra.mxu0 %v522
    %906 = vmatprep.subr.bf16.mxu0 %v529
    %907 = vmatpush1.bf16.msra.mxu0 %v528
    %908 = vmatprep.mubr.bf16.mxu0 %v149
    %909 = vmatmul.mubr.bf16.gmra.mrb[0].mxu0 %v148
    %v910 = vpop.f32.mrb[0].mxu0
    %v911 = vadd.f32 0.0, %v910
    %v912 = vpop.f32.mrb[0].mxu0
    %v913 = vadd.f32 0.0, %v912
    %v914 = vpop.f32.mrb[0].mxu0
    %v915 = vpop.f32.mrb[0].mxu0
    %916 = vdwg.mxu0
    %917 = vmatprep.subr.bf16.mxu0 %v441
    %918 = vmatpush1.bf16.msra.mxu0 %v440
    %919 = vmatprep.subr.bf16.mxu0 %v447
    %920 = vmatpush1.bf16.msra.mxu0 %v446
    %921 = vmatprep.subr.bf16.mxu0 %v453
    %922 = vmatpush1.bf16.msra.mxu0 %v452
    %923 = vmatprep.subr.bf16.mxu0 %v459
    %924 = vmatpush1.bf16.msra.mxu0 %v458
    %925 = vmatprep.subr.bf16.mxu0 %v465
    %926 = vmatpush1.bf16.msra.mxu0 %v464
    %927 = vmatprep.subr.bf16.mxu0 %v471
    %928 = vmatpush1.bf16.msra.mxu0 %v470
    %929 = vmatprep.subr.bf16.mxu0 %v477
    %930 = vmatpush1.bf16.msra.mxu0 %v476
    %931 = vmatprep.subr.bf16.mxu0 %v483
    %932 = vmatpush1.bf16.msra.mxu0 %v482
    %933 = vmatprep.subr.bf16.mxu0 %v489
    %934 = vmatpush1.bf16.msra.mxu0 %v488
    %935 = vmatprep.subr.bf16.mxu0 %v495
    %936 = vmatpush1.bf16.msra.mxu0 %v494
    %937 = vmatprep.subr.bf16.mxu0 %v501
    %938 = vmatpush1.bf16.msra.mxu0 %v500
    %939 = vmatprep.subr.bf16.mxu0 %v507
    %940 = vmatpush1.bf16.msra.mxu0 %v506
    %941 = vmatprep.subr.bf16.mxu0 %v513
    %942 = vmatpush1.bf16.msra.mxu0 %v512
    %943 = vmatprep.subr.bf16.mxu0 %v519
    %944 = vmatpush1.bf16.msra.mxu0 %v518
    %945 = vmatprep.subr.bf16.mxu0 %v525
    %946 = vmatpush1.bf16.msra.mxu0 %v524
    %947 = vmatprep.subr.bf16.mxu0 %v531
    %948 = vmatpush1.bf16.msra.mxu0 %v530
    %949 = vmatprep.mubr.bf16.mxu0 %v149
    %950 = vmatmul.mubr.bf16.gmra.mrb[0].mxu0 %v148
    %v951 = vpop.f32.mrb[0].mxu0
    %v952 = vadd.f32 0.0, %v951
    %v953 = vpop.f32.mrb[0].mxu0
    %v954 = vadd.f32 0.0, %v953
    %v955 = vpop.f32.mrb[0].mxu0
    %v956 = vpop.f32.mrb[0].mxu0
    %957 = vdwg.mxu0
    %958 = vmatprep.subr.bf16.mxu0 %v443
    %959 = vmatpush1.bf16.msra.mxu0 %v442
    %960 = vmatprep.subr.bf16.mxu0 %v449
    %961 = vmatpush1.bf16.msra.mxu0 %v448
    %962 = vmatprep.subr.bf16.mxu0 %v455
    %963 = vmatpush1.bf16.msra.mxu0 %v454
    %964 = vmatprep.subr.bf16.mxu0 %v461
    %965 = vmatpush1.bf16.msra.mxu0 %v460
    %966 = vmatprep.subr.bf16.mxu0 %v467
    %967 = vmatpush1.bf16.msra.mxu0 %v466
    %968 = vmatprep.subr.bf16.mxu0 %v473
    %969 = vmatpush1.bf16.msra.mxu0 %v472
    %970 = vmatprep.subr.bf16.mxu0 %v479
    %971 = vmatpush1.bf16.msra.mxu0 %v478
    %972 = vmatprep.subr.bf16.mxu0 %v485
    %973 = vmatpush1.bf16.msra.mxu0 %v484
    %974 = vmatprep.subr.bf16.mxu0 %v491
    %975 = vmatpush1.bf16.msra.mxu0 %v490
    %976 = vmatprep.subr.bf16.mxu0 %v497
    %977 = vmatpush1.bf16.msra.mxu0 %v496
    %978 = vmatprep.subr.bf16.mxu0 %v503
    %979 = vmatpush1.bf16.msra.mxu0 %v502
    %980 = vmatprep.subr.bf16.mxu0 %v509
    %981 = vmatpush1.bf16.msra.mxu0 %v508
    %982 = vmatprep.subr.bf16.mxu0 %v515
    %983 = vmatpush1.bf16.msra.mxu0 %v514
    %984 = vmatprep.subr.bf16.mxu0 %v521
    %985 = vmatpush1.bf16.msra.mxu0 %v520
    %986 = vmatprep.subr.bf16.mxu0 %v527
    %987 = vmatpush1.bf16.msra.mxu0 %v526
    %988 = vmatprep.subr.bf16.mxu0 %v533
    %989 = vmatpush1.bf16.msra.mxu0 %v532
    %990 = vmatprep.mubr.bf16.mxu0 %v149
    %991 = vmatmul.mubr.bf16.gmra.mrb[0].mxu0 %v148
    %v992 = vpop.f32.mrb[0].mxu0
    %v993 = vadd.f32 0.0, %v992
    %v994 = vpop.f32.mrb[0].mxu0
    %v995 = vadd.f32 0.0, %v994
    %v996 = vpop.f32.mrb[0].mxu0
    %v997 = vpop.f32.mrb[0].mxu0
    %998 = vdwg.mxu0
    %v999 = vadd.f32 %v788, %v911
    %v1000 = vadd.f32 %v790, %v913
    %v1001 = vadd.f32 %v829, %v952
    %v1002 = vadd.f32 %v831, %v954
    %v1003 = vadd.f32 %v870, %v993
    %v1004 = vadd.f32 %v872, %v995
    %1005 = vst [vmem:[#allocation7] sm:$0xff] %v999
    %1006 = vst [vmem:[#allocation7 + $0x8] sm:$0xff] %v1000
    %1007 = vst [vmem:[#allocation7 + $0x10] sm:$0xff] %v1001
    %1008 = vst [vmem:[#allocation7 + $0x18] sm:$0xff] %v1002
    %1009 = vst [vmem:[#allocation7 + $0x20] sm:$0xff] %v1003
    %1010 = vst [vmem:[#allocation7 + $0x28] sm:$0xff] %v1004
    // Predicated region
    $region18: #{tpu_custom_call.1} parent=1 // pred_check
      _
    $region19: #{tpu_custom_call.1} parent=1 // pred_check_branch
      %1012 = sbr.rel (0) target = $region21
    $region20: #{tpu_custom_call.1} parent=1 // pred_region
      %s1014 = ssub.s32 768, 768
      %1015 = vsyncadd [#allocation4], %s1014
      %s1017 = sshll.u32 [#allocation7], 4
      %s1018 = int_to_ptr.vmem [resolvable:$true] %s1017
      %1020 = dma.vmem_to_hbm [thread:$0]  %s1018, 768, %s2, [#allocation4]
    $region21: #{tpu_custom_call.1} parent=1 // pred_fallthru
      _
    // Predicated region
    $region22: #{tpu_custom_call.1} parent=1 // pred_check
      _
    $region23: #{tpu_custom_call.1} parent=1 // pred_check_branch
      %1022 = sbr.rel (0) target = $region25
    $region24: #{tpu_custom_call.1} parent=1 // pred_region
      %1023 = dma.done [#allocation4], 768
    $region25: #{tpu_custom_call.1} parent=1 // pred_fallthru
      _
    %1024 = vsyncpa [#allocation3], 1
    %1025 = vsyncpa [#allocation6], 1
    %1026 = vsyncpa [#allocation4], 1

</llo_original>
